<compile_context>
chip_gen: v6e
topology: v6e:2x2x1
jax: 0.10.0
libtpu: 0.0.40
codegen_flags: <defaults>
</compile_context>

<pallas_src>
import math

import jax
import jax.numpy as jnp
from jax.experimental import pallas as pl
from jax.experimental.pallas import tpu as pltpu

EPS = 1e-5
STRIDE = 2
MAX_ROW_BLOCK = 256          # rows per grid step once the batch gets large


# ------------------------------ Pallas kernel ------------------------------ #

def fused_forward_kernel(*refs):
    """refs = (x, W1, b1, ..., W6, b6, out).  Layers 1..5 have ReLU, layer 6 is the Linear."""
    x_ref, o_ref = refs[0], refs[-1]
    wb = refs[1:-1]
    n_layers = len(wb) // 2
    a = x_ref[...]
    for l in range(n_layers):
        w_ref, b_ref = wb[2 * l], wb[2 * l + 1]
        a = jnp.dot(a, w_ref[...], preferred_element_type=jnp.float32) + b_ref[...]
        if l < n_layers - 1:              # ReLU after every conv block, not after the Linear
            a = jnp.maximum(a, 0.0)
    o_ref[...] = a


def forward(x, weights, biases):
    """x: (B, 1, 200, 1) NCHW float32  ->  (B, 2)."""
    B = x.shape[0]
    x_flat = x[:, 0, :, 0]                       # (B, 200); Ci = 1 so channel-major flat = h
    f_in = x_flat.shape[1]

    row_block = B if B <= MAX_ROW_BLOCK else MAX_ROW_BLOCK
    b_pad = ((B + row_block - 1) // row_block) * row_block
    if b_pad != B:
        x_flat = jnp.pad(x_flat, ((0, b_pad - B), (0, 0)))

    in_specs = [pl.BlockSpec((row_block, f_in), lambda i: (i, 0))]
    args = [x_flat]
    for w, b in zip(weights, biases):
        in_specs.append(pl.BlockSpec(w.shape, lambda i: (0, 0)))
        in_specs.append(pl.BlockSpec(b.shape, lambda i: (0, 0)))
        args.append(w)
        args.append(b)

    n_out = weights[-1].shape[1]                 # 2
    out = pl.pallas_call(
        fused_forward_kernel,
        out_shape=jax.ShapeDtypeStruct((b_pad, n_out), jnp.float32),
        grid=(b_pad // row_block,),
        in_specs=in_specs,
        out_specs=pl.BlockSpec((row_block, n_out), lambda i: (i, 0)),
        compiler_params=pltpu.CompilerParams(
            dimension_semantics=("parallel",)),
    )(*args)
    return out[:B]


# ---------------------- parameter prep (wrapper-side) ----------------------- #

def conv_to_matrix(w, h_in, stride=STRIDE):
    """w: (Co, Ci, K) -> Toeplitz matrix A (Ci*h_in, Co*h_out), channel-major flattening."""
    co_n, ci_n, k = (int(d) for d in w.shape)
    h_out = (h_in - k) // stride + 1
    co, ci, kh, oh = jnp.meshgrid(jnp.arange(co_n), jnp.arange(ci_n),
                                  jnp.arange(k), jnp.arange(h_out), indexing="ij")
    rows = (ci * h_in + stride * oh + kh).reshape(-1)
    cols = (co * h_out + oh).reshape(-1)
    vals = jnp.broadcast_to(w[:, :, :, None], (co_n, ci_n, k, h_out)).reshape(-1)
    a = jnp.zeros((ci_n * h_in, co_n * h_out), jnp.float32).at[rows, cols].set(vals)
    return a, h_out


def fold_params(conv_params, lw, lb, h_in=200):
    """Conv stack + BN(eval) + Linear -> lists of (F_in, F_out) mats and (1, F_out) biases."""
    weights, biases = [], []
    scalevec = shiftvec = None
    h = h_in
    for p in conv_params:
        a, h_out = conv_to_matrix(p["w"], h)
        bvec = jnp.repeat(p["b"], h_out)                     # channel-major broadcast
        scale = p["gamma"] / jnp.sqrt(p["var"] + EPS)
        shift = p["beta"] - p["mean"] * scale
        if scalevec is not None:                             # fold previous layer's BN in
            bvec = shiftvec @ a + bvec
            a = scalevec[:, None] * a
        weights.append(a)
        biases.append(bvec.reshape(1, -1))
        scalevec = jnp.repeat(scale, h_out)
        shiftvec = jnp.repeat(shift, h_out)
        h = h_out
    # Final Linear; last conv's BN folds in.  Flatten order already matches view(-1, 10*4).
    wlin = lw.T                                              # (40, 2)
    blin = shiftvec @ wlin + lb
    wlin = scalevec[:, None] * wlin
    weights.append(wlin)
    biases.append(blin.reshape(1, -1))
    return weights, biases


# ------------------------- deterministic parameters ------------------------- #

def init_params(key):
    conv_cfg = [(1, 2, 8), (2, 3, 5), (3, 5, 5), (5, 10, 4), (10, 10, 4)]
    keys = jax.random.split(key, len(conv_cfg) + 1)
    params = []
    for k, (ci, co, kh) in zip(keys[:-1], conv_cfg):
        kw, kb = jax.random.split(k)
        bound = 1.0 / math.sqrt(ci * kh)
        params.append(dict(
            w=jax.random.uniform(kw, (co, ci, kh), jnp.float32, -bound, bound),
            b=jax.random.uniform(kb, (co,), jnp.float32, -bound, bound),
            gamma=jnp.ones((co,), jnp.float32),     # nn.BatchNorm2d eval-mode defaults
            beta=jnp.zeros((co,), jnp.float32),
            mean=jnp.zeros((co,), jnp.float32),
            var=jnp.ones((co,), jnp.float32),
        ))
    kw, kb = jax.random.split(keys[-1])
    bound = 1.0 / math.sqrt(40)
    lw = jax.random.uniform(kw, (2, 40), jnp.float32, -bound, bound)
    lb = jax.random.uniform(kb, (2,), jnp.float32, -bound, bound)
    return params, lw, lb


# --------------------- pure-JAX (PyTorch-faithful) reference ---------------- #

def ref_forward(x, conv_params, lw, lb):
    act = x
    for p in conv_params:
        w4 = p["w"][..., None]                               # (Co, Ci, K, 1) OIHW
        act = jax.lax.conv_general_dilated(
            act, w4, window_strides=(STRIDE, 1), padding="VALID",
            dimension_numbers=("NCHW", "OIHW", "NCHW"),
            precision=jax.lax.Precision.HIGHEST)
        act = act + p["b"][None, :, None, None]
        act = jnp.maximum(act, 0.0)
        scale = p["gamma"] / jnp.sqrt(p["var"] + EPS)
        shift = p["beta"] - p["mean"] * scale
        act = act * scale[None, :, None, None] + shift[None, :, None, None]
    feat = act.reshape(act.shape[0], -1)                     # (B, 10*4) channel-major
    return jnp.dot(feat, lw.T, precision=jax.lax.Precision.HIGHEST) + lb


# ----------------------------------- main ----------------------------------- #

if __name__ == "__main__":
    key = jax.random.PRNGKey(0)
    k_x, k_p = jax.random.split(key)

    # Height must be 200 so that 10 channels * 4 positions = Linear(10*4, 2) features.
    B = 2
    x = jax.random.normal(k_x, (B, 1, 200, 1), dtype=jnp.float32)

    conv_params, lw, lb = init_params(k_p)
    weights, biases = fold_params(conv_params, lw, lb, h_in=200)

    out = jax.jit(forward)(x, weights, biases)
    out = jax.block_until_ready(out)

    ref = ref_forward(x, conv_params, lw, lb)
    assert out.shape == (B, 2), out.shape
    assert jnp.allclose(out, ref, rtol=2e-3, atol=2e-3), (out, ref)

    print("KERNEL_OK")
</pallas_src>

<mosaic_0001>
module attributes {stable_mosaic.version = 11 : i64} {
  func.func @fused_forward_kernel(%arg0: i32, %arg1: memref<2x200xf32, #tpu.memory_space<vmem>>, %arg2: memref<200x194xf32, #tpu.memory_space<vmem>>, %arg3: memref<1x194xf32, #tpu.memory_space<vmem>>, %arg4: memref<194x141xf32, #tpu.memory_space<vmem>>, %arg5: memref<1x141xf32, #tpu.memory_space<vmem>>, %arg6: memref<141x110xf32, #tpu.memory_space<vmem>>, %arg7: memref<1x110xf32, #tpu.memory_space<vmem>>, %arg8: memref<110x100xf32, #tpu.memory_space<vmem>>, %arg9: memref<1x100xf32, #tpu.memory_space<vmem>>, %arg10: memref<100x40xf32, #tpu.memory_space<vmem>>, %arg11: memref<1x40xf32, #tpu.memory_space<vmem>>, %arg12: memref<40x2xf32, #tpu.memory_space<vmem>>, %arg13: memref<1x2xf32, #tpu.memory_space<vmem>>, %arg14: memref<2x2xf32, #tpu.memory_space<vmem>>) attributes {dimension_semantics = [#tpu.dimension_semantics<parallel>], iteration_bounds = array<i64: 1>, scalar_prefetch = 0 : i64, scratch_operands = 0 : i64, tpu.core_type = #tpu.core_type<tc>, window_params = [{transform_indices = @transform_0, window_bounds = array<i64: 2, 200>}, {pipeline_mode = #tpu.pipeline_mode<synchronous>, transform_indices = @transform_1, window_bounds = array<i64: 200, 194>}, {pipeline_mode = #tpu.pipeline_mode<synchronous>, transform_indices = @transform_2, window_bounds = array<i64: 1, 194>}, {pipeline_mode = #tpu.pipeline_mode<synchronous>, transform_indices = @transform_3, window_bounds = array<i64: 194, 141>}, {pipeline_mode = #tpu.pipeline_mode<synchronous>, transform_indices = @transform_4, window_bounds = array<i64: 1, 141>}, {pipeline_mode = #tpu.pipeline_mode<synchronous>, transform_indices = @transform_5, window_bounds = array<i64: 141, 110>}, {pipeline_mode = #tpu.pipeline_mode<synchronous>, transform_indices = @transform_6, window_bounds = array<i64: 1, 110>}, {pipeline_mode = #tpu.pipeline_mode<synchronous>, transform_indices = @transform_7, window_bounds = array<i64: 110, 100>}, {pipeline_mode = #tpu.pipeline_mode<synchronous>, transform_indices = @transform_8, window_bounds = array<i64: 1, 100>}, {pipeline_mode = #tpu.pipeline_mode<synchronous>, transform_indices = @transform_9, window_bounds = array<i64: 100, 40>}, {pipeline_mode = #tpu.pipeline_mode<synchronous>, transform_indices = @transform_10, window_bounds = array<i64: 1, 40>}, {pipeline_mode = #tpu.pipeline_mode<synchronous>, transform_indices = @transform_11, window_bounds = array<i64: 40, 2>}, {pipeline_mode = #tpu.pipeline_mode<synchronous>, transform_indices = @transform_12, window_bounds = array<i64: 1, 2>}, {transform_indices = @transform_13, window_bounds = array<i64: 2, 2>}]} {
    %c0 = arith.constant 0 : index
    %c0_0 = arith.constant 0 : index
    %0 = vector.load %arg1[%c0, %c0_0] : memref<2x200xf32, #tpu.memory_space<vmem>>, vector<2x200xf32>
    %c0_1 = arith.constant 0 : index
    %c0_2 = arith.constant 0 : index
    %1 = vector.load %arg2[%c0_1, %c0_2] : memref<200x194xf32, #tpu.memory_space<vmem>>, vector<200x194xf32>
    %cst = arith.constant dense<0.000000e+00> : vector<2x194xf32>
    %2 = tpu.matmul %0, %1, %cst {dimension_numbers = #tpu.dot_dimension_numbers<[1], [0], [0], [1], [0, 0, 1, 1], [], []>} : vector<2x200xf32>, vector<200x194xf32>, vector<2x194xf32> -> vector<2x194xf32>
    %c0_3 = arith.constant 0 : index
    %c0_4 = arith.constant 0 : index
    %3 = vector.load %arg3[%c0_3, %c0_4] : memref<1x194xf32, #tpu.memory_space<vmem>>, vector<1x194xf32>
    %4 = vector.broadcast %3 : vector<1x194xf32> to vector<2x194xf32>
    %5 = arith.addf %2, %4 : vector<2x194xf32>
    %cst_5 = arith.constant 0.000000e+00 : f32
    %6 = vector.broadcast %cst_5 : f32 to vector<2x194xf32>
    %7 = arith.maximumf %5, %6 : vector<2x194xf32>
    %c0_6 = arith.constant 0 : index
    %c0_7 = arith.constant 0 : index
    %8 = vector.load %arg4[%c0_6, %c0_7] : memref<194x141xf32, #tpu.memory_space<vmem>>, vector<194x141xf32>
    %cst_8 = arith.constant dense<0.000000e+00> : vector<2x141xf32>
    %9 = tpu.matmul %7, %8, %cst_8 {dimension_numbers = #tpu.dot_dimension_numbers<[1], [0], [0], [1], [0, 0, 1, 1], [], []>} : vector<2x194xf32>, vector<194x141xf32>, vector<2x141xf32> -> vector<2x141xf32>
    %c0_9 = arith.constant 0 : index
    %c0_10 = arith.constant 0 : index
    %10 = vector.load %arg5[%c0_9, %c0_10] : memref<1x141xf32, #tpu.memory_space<vmem>>, vector<1x141xf32>
    %11 = vector.broadcast %10 : vector<1x141xf32> to vector<2x141xf32>
    %12 = arith.addf %9, %11 : vector<2x141xf32>
    %cst_11 = arith.constant 0.000000e+00 : f32
    %13 = vector.broadcast %cst_11 : f32 to vector<2x141xf32>
    %14 = arith.maximumf %12, %13 : vector<2x141xf32>
    %c0_12 = arith.constant 0 : index
    %c0_13 = arith.constant 0 : index
    %15 = vector.load %arg6[%c0_12, %c0_13] : memref<141x110xf32, #tpu.memory_space<vmem>>, vector<141x110xf32>
    %cst_14 = arith.constant dense<0.000000e+00> : vector<2x110xf32>
    %16 = tpu.matmul %14, %15, %cst_14 {dimension_numbers = #tpu.dot_dimension_numbers<[1], [0], [0], [1], [0, 0, 1, 1], [], []>} : vector<2x141xf32>, vector<141x110xf32>, vector<2x110xf32> -> vector<2x110xf32>
    %c0_15 = arith.constant 0 : index
    %c0_16 = arith.constant 0 : index
    %17 = vector.load %arg7[%c0_15, %c0_16] : memref<1x110xf32, #tpu.memory_space<vmem>>, vector<1x110xf32>
    %18 = vector.broadcast %17 : vector<1x110xf32> to vector<2x110xf32>
    %19 = arith.addf %16, %18 : vector<2x110xf32>
    %cst_17 = arith.constant 0.000000e+00 : f32
    %20 = vector.broadcast %cst_17 : f32 to vector<2x110xf32>
    %21 = arith.maximumf %19, %20 : vector<2x110xf32>
    %c0_18 = arith.constant 0 : index
    %c0_19 = arith.constant 0 : index
    %22 = vector.load %arg8[%c0_18, %c0_19] : memref<110x100xf32, #tpu.memory_space<vmem>>, vector<110x100xf32>
    %cst_20 = arith.constant dense<0.000000e+00> : vector<2x100xf32>
    %23 = tpu.matmul %21, %22, %cst_20 {dimension_numbers = #tpu.dot_dimension_numbers<[1], [0], [0], [1], [0, 0, 1, 1], [], []>} : vector<2x110xf32>, vector<110x100xf32>, vector<2x100xf32> -> vector<2x100xf32>
    %c0_21 = arith.constant 0 : index
    %c0_22 = arith.constant 0 : index
    %24 = vector.load %arg9[%c0_21, %c0_22] : memref<1x100xf32, #tpu.memory_space<vmem>>, vector<1x100xf32>
    %25 = vector.broadcast %24 : vector<1x100xf32> to vector<2x100xf32>
    %26 = arith.addf %23, %25 : vector<2x100xf32>
    %cst_23 = arith.constant 0.000000e+00 : f32
    %27 = vector.broadcast %cst_23 : f32 to vector<2x100xf32>
    %28 = arith.maximumf %26, %27 : vector<2x100xf32>
    %c0_24 = arith.constant 0 : index
    %c0_25 = arith.constant 0 : index
    %29 = vector.load %arg10[%c0_24, %c0_25] : memref<100x40xf32, #tpu.memory_space<vmem>>, vector<100x40xf32>
    %cst_26 = arith.constant dense<0.000000e+00> : vector<2x40xf32>
    %30 = tpu.matmul %28, %29, %cst_26 {dimension_numbers = #tpu.dot_dimension_numbers<[1], [0], [0], [1], [0, 0, 1, 1], [], []>} : vector<2x100xf32>, vector<100x40xf32>, vector<2x40xf32> -> vector<2x40xf32>
    %c0_27 = arith.constant 0 : index
    %c0_28 = arith.constant 0 : index
    %31 = vector.load %arg11[%c0_27, %c0_28] : memref<1x40xf32, #tpu.memory_space<vmem>>, vector<1x40xf32>
    %32 = vector.broadcast %31 : vector<1x40xf32> to vector<2x40xf32>
    %33 = arith.addf %30, %32 : vector<2x40xf32>
    %cst_29 = arith.constant 0.000000e+00 : f32
    %34 = vector.broadcast %cst_29 : f32 to vector<2x40xf32>
    %35 = arith.maximumf %33, %34 : vector<2x40xf32>
    %c0_30 = arith.constant 0 : index
    %c0_31 = arith.constant 0 : index
    %36 = vector.load %arg12[%c0_30, %c0_31] : memref<40x2xf32, #tpu.memory_space<vmem>>, vector<40x2xf32>
    %cst_32 = arith.constant dense<0.000000e+00> : vector<2x2xf32>
    %37 = tpu.matmul %35, %36, %cst_32 {dimension_numbers = #tpu.dot_dimension_numbers<[1], [0], [0], [1], [0, 0, 1, 1], [], []>} : vector<2x40xf32>, vector<40x2xf32>, vector<2x2xf32> -> vector<2x2xf32>
    %c0_33 = arith.constant 0 : index
    %c0_34 = arith.constant 0 : index
    %38 = vector.load %arg13[%c0_33, %c0_34] : memref<1x2xf32, #tpu.memory_space<vmem>>, vector<1x2xf32>
    %39 = vector.broadcast %38 : vector<1x2xf32> to vector<2x2xf32>
    %40 = arith.addf %37, %39 : vector<2x2xf32>
    %c0_35 = arith.constant 0 : index
    %c0_36 = arith.constant 0 : index
    %41 = vector.load %arg14[%c0_35, %c0_36] : memref<2x2xf32, #tpu.memory_space<vmem>>, vector<2x2xf32>
    tpu.vector_store %arg14[%c0_35, %c0_36], %40 {strides = array<i32>} : memref<2x2xf32, #tpu.memory_space<vmem>>, vector<2x2xf32>,
    return
  }
  func.func @transform_0(%arg0: i32) -> (i32, i32) {
    %c0_i32 = arith.constant 0 : i32
    %c0_i32_0 = arith.constant 0 : i32
    return %arg0, %c0_i32 : i32, i32
  }
  func.func @transform_1(%arg0: i32) -> (i32, i32) {
    %c0_i32 = arith.constant 0 : i32
    %c0_i32_0 = arith.constant 0 : i32
    %c0_i32_1 = arith.constant 0 : i32
    return %c0_i32, %c0_i32_0 : i32, i32
  }
  func.func @transform_2(%arg0: i32) -> (i32, i32) {
    %c0_i32 = arith.constant 0 : i32
    %c0_i32_0 = arith.constant 0 : i32
    %c0_i32_1 = arith.constant 0 : i32
    return %c0_i32, %c0_i32_0 : i32, i32
  }
  func.func @transform_3(%arg0: i32) -> (i32, i32) {
    %c0_i32 = arith.constant 0 : i32
    %c0_i32_0 = arith.constant 0 : i32
    %c0_i32_1 = arith.constant 0 : i32
    return %c0_i32, %c0_i32_0 : i32, i32
  }
  func.func @transform_4(%arg0: i32) -> (i32, i32) {
    %c0_i32 = arith.constant 0 : i32
    %c0_i32_0 = arith.constant 0 : i32
    %c0_i32_1 = arith.constant 0 : i32
    return %c0_i32, %c0_i32_0 : i32, i32
  }
  func.func @transform_5(%arg0: i32) -> (i32, i32) {
    %c0_i32 = arith.constant 0 : i32
    %c0_i32_0 = arith.constant 0 : i32
    %c0_i32_1 = arith.constant 0 : i32
    return %c0_i32, %c0_i32_0 : i32, i32
  }
  func.func @transform_6(%arg0: i32) -> (i32, i32) {
    %c0_i32 = arith.constant 0 : i32
    %c0_i32_0 = arith.constant 0 : i32
    %c0_i32_1 = arith.constant 0 : i32
    return %c0_i32, %c0_i32_0 : i32, i32
  }
  func.func @transform_7(%arg0: i32) -> (i32, i32) {
    %c0_i32 = arith.constant 0 : i32
    %c0_i32_0 = arith.constant 0 : i32
    %c0_i32_1 = arith.constant 0 : i32
    return %c0_i32, %c0_i32_0 : i32, i32
  }
  func.func @transform_8(%arg0: i32) -> (i32, i32) {
    %c0_i32 = arith.constant 0 : i32
    %c0_i32_0 = arith.constant 0 : i32
    %c0_i32_1 = arith.constant 0 : i32
    return %c0_i32, %c0_i32_0 : i32, i32
  }
  func.func @transform_9(%arg0: i32) -> (i32, i32) {
    %c0_i32 = arith.constant 0 : i32
    %c0_i32_0 = arith.constant 0 : i32
    %c0_i32_1 = arith.constant 0 : i32
    return %c0_i32, %c0_i32_0 : i32, i32
  }
  func.func @transform_10(%arg0: i32) -> (i32, i32) {
    %c0_i32 = arith.constant 0 : i32
    %c0_i32_0 = arith.constant 0 : i32
    %c0_i32_1 = arith.constant 0 : i32
    return %c0_i32, %c0_i32_0 : i32, i32
  }
  func.func @transform_11(%arg0: i32) -> (i32, i32) {
    %c0_i32 = arith.constant 0 : i32
    %c0_i32_0 = arith.constant 0 : i32
    %c0_i32_1 = arith.constant 0 : i32
    return %c0_i32, %c0_i32_0 : i32, i32
  }
  func.func @transform_12(%arg0: i32) -> (i32, i32) {
    %c0_i32 = arith.constant 0 : i32
    %c0_i32_0 = arith.constant 0 : i32
    %c0_i32_1 = arith.constant 0 : i32
    return %c0_i32, %c0_i32_0 : i32, i32
  }
  func.func @transform_13(%arg0: i32) -> (i32, i32) {
    %c0_i32 = arith.constant 0 : i32
    %c0_i32_0 = arith.constant 0 : i32
    return %arg0, %c0_i32 : i32, i32
  }
}

</mosaic_0001>

<llo_original>
// kernel: forward.1
$region0: #{forward.1}
  #allocation0 [shape = 'u32[]', space=smem, size = 0x4, offset = 0x4, fixed_abs, tag = 'smem constant byte address 0x4 - core index']
  #allocation1 [shape = 'u32[144,128]{1,0:T(1,128)}', space=vmem, size = 0x12000, scoped, tag = 'internal scratch']
  %s0 = inlined_call_operand.vmem [shape: f32[2,200], index: 0, kind: input, shape index: {}]
  %s1 = inlined_call_operand.vmem [shape: f32[200,194], index: 1, kind: input, shape index: {}]
  %s2 = inlined_call_operand.vmem [shape: f32[1,194], index: 2, kind: input, shape index: {}]
  %s3 = inlined_call_operand.vmem [shape: f32[194,141], index: 3, kind: input, shape index: {}]
  %s4 = inlined_call_operand.vmem [shape: f32[1,141], index: 4, kind: input, shape index: {}]
  %s5 = inlined_call_operand.vmem [shape: f32[141,110], index: 5, kind: input, shape index: {}]
  %s6 = inlined_call_operand.vmem [shape: f32[1,110], index: 6, kind: input, shape index: {}]
  %s7 = inlined_call_operand.vmem [shape: f32[110,100], index: 7, kind: input, shape index: {}]
  %s8 = inlined_call_operand.vmem [shape: f32[1,100], index: 8, kind: input, shape index: {}]
  %s9 = inlined_call_operand.vmem [shape: f32[100,40], index: 9, kind: input, shape index: {}]
  %s10 = inlined_call_operand.vmem [shape: f32[1,40], index: 10, kind: input, shape index: {}]
  %s11 = inlined_call_operand.vmem [shape: f32[40,2], index: 11, kind: input, shape index: {}]
  %s12 = inlined_call_operand.vmem [shape: f32[1,2], index: 12, kind: input, shape index: {}]
  %s13 = inlined_call_operand.hbm [shape: f32[2,2], index: 13, kind: output, shape index: {}]
  %s14 = sld [smem:[#allocation0]]
  $region62: #{forward.1} parent=0
    _
  %s16 = ssub.s32 1, %s14
  %s17 = scalar_select 0, %s16, %s14
  $region1: #{forward.1} parent=0
    #allocation2 [shape = 'u8[1024]{0}', space=vmem, size = 0x400, scoped, tag = 'output window, operand 0, single buffered']
    #allocation3 [shape = 's32[1]{0}', space=sflag, size = 0x4, scoped, tag = 'scoped memory for forward.1']
    %18 = vsyncpa [#allocation3], 0
    // Predicated region
    $region2: #{forward.1} parent=1 // pred_check
      _
    $region3: #{forward.1} parent=1 // pred_check_branch
      %20 = sbr.rel (0) target = $region5
    $region4: #{forward.1} parent=1 // pred_region
      _
    $region5: #{forward.1} parent=1 // pred_fallthru
      _
    // Predicated region
    $region6: #{forward.1} parent=1 // pred_check
      _
    $region7: #{forward.1} parent=1 // pred_check_branch
      %22 = sbr.rel (0) target = $region9
    $region8: #{forward.1} parent=1 // pred_region
      _
    $region9: #{forward.1} parent=1 // pred_fallthru
      _
    // Predicated region
    $region10: #{forward.1} parent=1 // pred_check
      _
    $region11: #{forward.1} parent=1 // pred_check_branch
      %24 = sbr.rel (0) target = $region13
    $region12: #{forward.1} parent=1 // pred_region
      _
    $region13: #{forward.1} parent=1 // pred_fallthru
      _
    // Predicated region
    $region14: #{forward.1} parent=1 // pred_check
      _
    $region15: #{forward.1} parent=1 // pred_check_branch
      %26 = sbr.rel (0) target = $region17
    $region16: #{forward.1} parent=1 // pred_region
      _
    $region17: #{forward.1} parent=1 // pred_fallthru
      _
    // Predicated region
    $region18: #{forward.1} parent=1 // pred_check
      _
    $region19: #{forward.1} parent=1 // pred_check_branch
      %28 = sbr.rel (0) target = $region21
    $region20: #{forward.1} parent=1 // pred_region
      _
    $region21: #{forward.1} parent=1 // pred_fallthru
      _
    // Predicated region
    $region22: #{forward.1} parent=1 // pred_check
      _
    $region23: #{forward.1} parent=1 // pred_check_branch
      %30 = sbr.rel (0) target = $region25
    $region24: #{forward.1} parent=1 // pred_region
      _
    $region25: #{forward.1} parent=1 // pred_fallthru
      _
    // Predicated region
    $region26: #{forward.1} parent=1 // pred_check
      _
    $region27: #{forward.1} parent=1 // pred_check_branch
      %32 = sbr.rel (0) target = $region29
    $region28: #{forward.1} parent=1 // pred_region
      _
    $region29: #{forward.1} parent=1 // pred_fallthru
      _
    // Predicated region
    $region30: #{forward.1} parent=1 // pred_check
      _
    $region31: #{forward.1} parent=1 // pred_check_branch
      %34 = sbr.rel (0) target = $region33
    $region32: #{forward.1} parent=1 // pred_region
      _
    $region33: #{forward.1} parent=1 // pred_fallthru
      _
    // Predicated region
    $region34: #{forward.1} parent=1 // pred_check
      _
    $region35: #{forward.1} parent=1 // pred_check_branch
      %36 = sbr.rel (0) target = $region37
    $region36: #{forward.1} parent=1 // pred_region
      _
    $region37: #{forward.1} parent=1 // pred_fallthru
      _
    // Predicated region
    $region38: #{forward.1} parent=1 // pred_check
      _
    $region39: #{forward.1} parent=1 // pred_check_branch
      %38 = sbr.rel (0) target = $region41
    $region40: #{forward.1} parent=1 // pred_region
      _
    $region41: #{forward.1} parent=1 // pred_fallthru
      _
    // Predicated region
    $region42: #{forward.1} parent=1 // pred_check
      _
    $region43: #{forward.1} parent=1 // pred_check_branch
      %40 = sbr.rel (0) target = $region45
    $region44: #{forward.1} parent=1 // pred_region
      _
    $region45: #{forward.1} parent=1 // pred_fallthru
      _
    // Predicated region
    $region46: #{forward.1} parent=1 // pred_check
      _
    $region47: #{forward.1} parent=1 // pred_check_branch
      %42 = sbr.rel (0) target = $region49
    $region48: #{forward.1} parent=1 // pred_region
      _
    $region49: #{forward.1} parent=1 // pred_fallthru
      _
    // Predicated region
    $region50: #{forward.1} parent=1 // pred_check
      _
    $region51: #{forward.1} parent=1 // pred_check_branch
      %44 = sbr.rel (0) target = $region53
    $region52: #{forward.1} parent=1 // pred_region
      _
    $region53: #{forward.1} parent=1 // pred_fallthru
      _
    %v45 = vld [vmem:[%s0] sm:$0xf]
    %v46 = vld [vmem:[%s1] sm:$0xff]
    %v47 = vld [vmem:[%s1 + $0x8] sm:$0xff]
    %v48 = vld [vmem:[%s1 + $0x10] sm:$0xff]
    %v49 = vld [vmem:[%s1 + $0x18] sm:$0xff]
    %v50 = vld [vmem:[%s1 + $0x20] sm:$0xff]
    %v51 = vld [vmem:[%s1 + $0x28] sm:$0xff]
    %v52 = vld [vmem:[%s1 + $0x30] sm:$0xff]
    %v53 = vld [vmem:[%s1 + $0x38] sm:$0xff]
    %v54 = vld [vmem:[%s1 + $0x40] sm:$0xff]
    %v55 = vld [vmem:[%s1 + $0x48] sm:$0xff]
    %v56 = vld [vmem:[%s1 + $0x50] sm:$0xff]
    %v57 = vld [vmem:[%s1 + $0x58] sm:$0xff]
    %v58 = vld [vmem:[%s1 + $0x60] sm:$0xff]
    %v59 = vld [vmem:[%s1 + $0x68] sm:$0xff]
    %v60 = vld [vmem:[%s1 + $0x70] sm:$0xff]
    %v61 = vld [vmem:[%s1 + $0x78] sm:$0xff]
    %v62 = vld [vmem:[%s1 + $0x80] sm:$0xff]
    %v63 = vld [vmem:[%s1 + $0x88] sm:$0xff]
    %v64 = vld [vmem:[%s1 + $0x90] sm:$0xff]
    %v65 = vld [vmem:[%s1 + $0x98] sm:$0xff]
    %v66 = vld [vmem:[%s1 + $0xa0] sm:$0xff]
    %v67 = vld [vmem:[%s1 + $0xa8] sm:$0xff]
    %v68 = vld [vmem:[%s1 + $0xb0] sm:$0xff]
    %v69 = vld [vmem:[%s1 + $0xb8] sm:$0xff]
    %v70 = vld [vmem:[%s1 + $0xc0] sm:$0xff]
    %v71 = vld [vmem:[%s1 + $0xc8] sm:$0xff]
    %v72 = vld [vmem:[%s1 + $0xd0] sm:$0xff]
    %v73 = vld [vmem:[%s1 + $0xd8] sm:$0xff]
    %v74 = vld [vmem:[%s1 + $0xe0] sm:$0xff]
    %v75 = vld [vmem:[%s1 + $0xe8] sm:$0xff]
    %v76 = vld [vmem:[%s1 + $0xf0] sm:$0xff]
    %v77 = vld [vmem:[%s1 + $0xf8] sm:$0xff]
    %v78 = vld [vmem:[%s1 + $0x100] sm:$0xff]
    %v79 = vld [vmem:[%s1 + $0x108] sm:$0xff]
    %v80 = vld [vmem:[%s1 + $0x110] sm:$0xff]
    %v81 = vld [vmem:[%s1 + $0x118] sm:$0xff]
    %v82 = vld [vmem:[%s1 + $0x120] sm:$0xff]
    %v83 = vld [vmem:[%s1 + $0x128] sm:$0xff]
    %v84 = vld [vmem:[%s1 + $0x130] sm:$0xff]
    %v85 = vld [vmem:[%s1 + $0x138] sm:$0xff]
    %v86 = vld [vmem:[%s1 + $0x140] sm:$0xff]
    %v87 = vld [vmem:[%s1 + $0x148] sm:$0xff]
    %v88 = vld [vmem:[%s1 + $0x150] sm:$0xff]
    %v89 = vld [vmem:[%s1 + $0x158] sm:$0xff]
    %v90 = vld [vmem:[%s1 + $0x160] sm:$0xff]
    %v91 = vld [vmem:[%s1 + $0x168] sm:$0xff]
    %v92 = vld [vmem:[%s1 + $0x170] sm:$0xff]
    %v93 = vld [vmem:[%s1 + $0x178] sm:$0xff]
    %v94 = vld [vmem:[%s1 + $0x180] sm:$0xff]
    %v95 = vld [vmem:[%s1 + $0x188] sm:$0xff]
    %v96 = vld [vmem:[%s2] sm:$0x3]
    %v98 = vlaneseq
    %v99 = vshrl.u32 %v98, 7
    %v100 = vsub.s32 0, %v99
    %v101 = vrot.slane %v96, %v100
    %v102 = vlaneseq
    %v103 = vshrl.u32 %v102, 7
    %v104 = vsub.s32 1, %v103
    %v105 = vrot.slane %v96, %v104
    %v110 = vunpack.c.l.s4 1983009808
    %v111 = vunpack.c.0.s8 %v110
    %v112 = vlaneseq
    %v113 = vshrl.u32 %v112, 7
    %v114 = vsub.s32 %v111, %v113
    %v115 = vrot.slane %v45, %v114
    %v116 = vcombine.high %v115, %v115
    %vm118 = vcmask 588800
    %v119 = vsel %vm118, %v116, 0
    %121 = vmatprep.subr.mxu0 %v77
    %122 = vmatpush1.msra.mxu0 %v76
    %123 = vmatprep.subr.mxu0 %v75
    %124 = vmatpush1.msra.mxu0 %v74
    %125 = vmatprep.subr.mxu0 %v73
    %126 = vmatpush1.msra.mxu0 %v72
    %127 = vmatprep.subr.mxu0 %v71
    %128 = vmatpush1.msra.mxu0 %v70
    %129 = vmatprep.subr.mxu0 %v69
    %130 = vmatpush1.msra.mxu0 %v68
    %131 = vmatprep.subr.mxu0 %v67
    %132 = vmatpush1.msra.mxu0 %v66
    %133 = vmatprep.subr.mxu0 %v65
    %134 = vmatpush1.msra.mxu0 %v64
    %135 = vmatprep.subr.mxu0 %v63
    %136 = vmatpush1.msra.mxu0 %v62
    %137 = vmatprep.subr.mxu0 %v61
    %138 = vmatpush1.msra.mxu0 %v60
    %139 = vmatprep.subr.mxu0 %v59
    %140 = vmatpush1.msra.mxu0 %v58
    %141 = vmatprep.subr.mxu0 %v57
    %142 = vmatpush1.msra.mxu0 %v56
    %143 = vmatprep.subr.mxu0 %v55
    %144 = vmatpush1.msra.mxu0 %v54
    %145 = vmatprep.subr.mxu0 %v53
    %146 = vmatpush1.msra.mxu0 %v52
    %147 = vmatprep.subr.mxu0 %v51
    %148 = vmatpush1.msra.mxu0 %v50
    %149 = vmatprep.subr.mxu0 %v49
    %150 = vmatpush1.msra.mxu0 %v48
    %151 = vmatprep.subr.mxu0 %v47
    %152 = vmatpush1.msra.mxu0 %v46
    %153 = vmatprep.subr.mxu0 0.0
    %154 = vmatpush2.msra.mxu0 0.0
    %155 = vmatprep.subr.mxu0 0.0
    %156 = vmatpush2.msra.mxu0 0.0
    %157 = vmatprep.subr.mxu0 0.0
    %158 = vmatpush2.msra.mxu0 0.0
    %159 = vmatprep.subr.mxu0 0.0
    %160 = vmatpush2.msra.mxu0 0.0
    %161 = vmatprep.subr.mxu0 0.0
    %162 = vmatpush2.msra.mxu0 0.0
    %163 = vmatprep.subr.mxu0 0.0
    %164 = vmatpush2.msra.mxu0 0.0
    %165 = vmatprep.subr.mxu0 0.0
    %166 = vmatpush2.msra.mxu0 0.0
    %167 = vmatprep.subr.mxu0 %v95
    %168 = vmatpush2.msra.mxu0 %v94
    %169 = vmatprep.subr.mxu0 %v93
    %170 = vmatpush2.msra.mxu0 %v92
    %171 = vmatprep.subr.mxu0 %v91
    %172 = vmatpush2.msra.mxu0 %v90
    %173 = vmatprep.subr.mxu0 %v89
    %174 = vmatpush2.msra.mxu0 %v88
    %175 = vmatprep.subr.mxu0 %v87
    %176 = vmatpush2.msra.mxu0 %v86
    %177 = vmatprep.subr.mxu0 %v85
    %178 = vmatpush2.msra.mxu0 %v84
    %179 = vmatprep.subr.mxu0 %v83
    %180 = vmatpush2.msra.mxu0 %v82
    %181 = vmatprep.subr.mxu0 %v81
    %182 = vmatpush2.msra.mxu0 %v80
    %183 = vmatprep.subr.mxu0 %v79
    %184 = vmatpush2.msra.mxu0 %v78
    %185 = vmatprep.mubr.f32.mxu0 %v119
    %186 = vmatmul.mubr.f32.gmra.mxu0 %v115
    %v187 = vpop.f32.mrf.mxu0
    %v188 = vadd.f32 %v101, %v187
    %v189 = vpop.f32.mrf.mxu0
    %v190 = vadd.f32 %v105, %v189
    %191 = vdwg.mxu0
    %v192 = vmax.f32 %v188, 0.0
    %v193 = vmax.f32 %v190, 0.0
    %v194 = vld [vmem:[%s3] sm:$0xff]
    %v195 = vld [vmem:[%s3 + $0x8] sm:$0xff]
    %v196 = vld [vmem:[%s3 + $0x10] sm:$0xff]
    %v197 = vld [vmem:[%s3 + $0x18] sm:$0xff]
    %v198 = vld [vmem:[%s3 + $0x20] sm:$0xff]
    %v199 = vld [vmem:[%s3 + $0x28] sm:$0xff]
    %v200 = vld [vmem:[%s3 + $0x30] sm:$0xff]
    %v201 = vld [vmem:[%s3 + $0x38] sm:$0xff]
    %v202 = vld [vmem:[%s3 + $0x40] sm:$0xff]
    %v203 = vld [vmem:[%s3 + $0x48] sm:$0xff]
    %v204 = vld [vmem:[%s3 + $0x50] sm:$0xff]
    %v205 = vld [vmem:[%s3 + $0x58] sm:$0xff]
    %v206 = vld [vmem:[%s3 + $0x60] sm:$0xff]
    %v207 = vld [vmem:[%s3 + $0x68] sm:$0xff]
    %v208 = vld [vmem:[%s3 + $0x70] sm:$0xff]
    %v209 = vld [vmem:[%s3 + $0x78] sm:$0xff]
    %v210 = vld [vmem:[%s3 + $0x80] sm:$0xff]
    %v211 = vld [vmem:[%s3 + $0x88] sm:$0xff]
    %v212 = vld [vmem:[%s3 + $0x90] sm:$0xff]
    %v213 = vld [vmem:[%s3 + $0x98] sm:$0xff]
    %v214 = vld [vmem:[%s3 + $0xa0] sm:$0xff]
    %v215 = vld [vmem:[%s3 + $0xa8] sm:$0xff]
    %v216 = vld [vmem:[%s3 + $0xb0] sm:$0xff]
    %v217 = vld [vmem:[%s3 + $0xb8] sm:$0xff]
    %v218 = vld [vmem:[%s3 + $0xc0] sm:$0xff]
    %v219 = vld [vmem:[%s3 + $0xc8] sm:$0xff]
    %v220 = vld [vmem:[%s3 + $0xd0] sm:$0xff]
    %v221 = vld [vmem:[%s3 + $0xd8] sm:$0xff]
    %v222 = vld [vmem:[%s3 + $0xe0] sm:$0xff]
    %v223 = vld [vmem:[%s3 + $0xe8] sm:$0xff]
    %v224 = vld [vmem:[%s3 + $0xf0] sm:$0xff]
    %v225 = vld [vmem:[%s3 + $0xf8] sm:$0xff]
    %v226 = vld [vmem:[%s3 + $0x100] sm:$0xff]
    %v227 = vld [vmem:[%s3 + $0x108] sm:$0xff]
    %v228 = vld [vmem:[%s3 + $0x110] sm:$0xff]
    %v229 = vld [vmem:[%s3 + $0x118] sm:$0xff]
    %v230 = vld [vmem:[%s3 + $0x120] sm:$0xff]
    %v231 = vld [vmem:[%s3 + $0x128] sm:$0xff]
    %v232 = vld [vmem:[%s3 + $0x130] sm:$0xff]
    %v233 = vld [vmem:[%s3 + $0x138] sm:$0xff]
    %v234 = vld [vmem:[%s3 + $0x140] sm:$0xff]
    %v235 = vld [vmem:[%s3 + $0x148] sm:$0xff]
    %v236 = vld [vmem:[%s3 + $0x150] sm:$0xff]
    %v237 = vld [vmem:[%s3 + $0x158] sm:$0xff]
    %v238 = vld [vmem:[%s3 + $0x160] sm:$0xff]
    %v239 = vld [vmem:[%s3 + $0x168] sm:$0xff]
    %v240 = vld [vmem:[%s3 + $0x170] sm:$0xff]
    %v241 = vld [vmem:[%s3 + $0x178] sm:$0xff]
    %v242 = vld [vmem:[%s3 + $0x180] sm:$0x3]
    %v243 = vld [vmem:[%s3 + $0x188] sm:$0x3]
    %v244 = vld [vmem:[%s4] sm:$0x3]
    %v246 = vlaneseq
    %v247 = vshrl.u32 %v246, 7
    %v248 = vsub.s32 0, %v247
    %v249 = vrot.slane %v244, %v248
    %v250 = vlaneseq
    %v251 = vshrl.u32 %v250, 7
    %v252 = vsub.s32 1, %v251
    %v253 = vrot.slane %v244, %v252
    %vm256 = vcmask 539648
    %v258 = vsel %vm256, %v193, 0
    %vm260 = vcmask 1041408
    %v262 = vsel %vm260, %v242, 0
    %v265 = vsel %vm260, %v243, 0
    %267 = vmatprep.subr.mxu0 %v225
    %268 = vmatpush1.msra.mxu0 %v224
    %269 = vmatprep.subr.mxu0 %v223
    %270 = vmatpush1.msra.mxu0 %v222
    %271 = vmatprep.subr.mxu0 %v221
    %272 = vmatpush1.msra.mxu0 %v220
    %273 = vmatprep.subr.mxu0 %v219
    %274 = vmatpush1.msra.mxu0 %v218
    %275 = vmatprep.subr.mxu0 %v217
    %276 = vmatpush1.msra.mxu0 %v216
    %277 = vmatprep.subr.mxu0 %v215
    %278 = vmatpush1.msra.mxu0 %v214
    %279 = vmatprep.subr.mxu0 %v213
    %280 = vmatpush1.msra.mxu0 %v212
    %281 = vmatprep.subr.mxu0 %v211
    %282 = vmatpush1.msra.mxu0 %v210
    %283 = vmatprep.subr.mxu0 %v209
    %284 = vmatpush1.msra.mxu0 %v208
    %285 = vmatprep.subr.mxu0 %v207
    %286 = vmatpush1.msra.mxu0 %v206
    %287 = vmatprep.subr.mxu0 %v205
    %288 = vmatpush1.msra.mxu0 %v204
    %289 = vmatprep.subr.mxu0 %v203
    %290 = vmatpush1.msra.mxu0 %v202
    %291 = vmatprep.subr.mxu0 %v201
    %292 = vmatpush1.msra.mxu0 %v200
    %293 = vmatprep.subr.mxu0 %v199
    %294 = vmatpush1.msra.mxu0 %v198
    %295 = vmatprep.subr.mxu0 %v197
    %296 = vmatpush1.msra.mxu0 %v196
    %297 = vmatprep.subr.mxu0 %v195
    %298 = vmatpush1.msra.mxu0 %v194
    %299 = vmatprep.subr.mxu0 0.0
    %300 = vmatpush2.msra.mxu0 0.0
    %301 = vmatprep.subr.mxu0 0.0
    %302 = vmatpush2.msra.mxu0 0.0
    %303 = vmatprep.subr.mxu0 0.0
    %304 = vmatpush2.msra.mxu0 0.0
    %305 = vmatprep.subr.mxu0 0.0
    %306 = vmatpush2.msra.mxu0 0.0
    %307 = vmatprep.subr.mxu0 0.0
    %308 = vmatpush2.msra.mxu0 0.0
    %309 = vmatprep.subr.mxu0 0.0
    %310 = vmatpush2.msra.mxu0 0.0
    %311 = vmatprep.subr.mxu0 0.0
    %312 = vmatpush2.msra.mxu0 0.0
    %313 = vmatprep.subr.mxu0 %v265
    %314 = vmatpush2.msra.mxu0 %v262
    %315 = vmatprep.subr.mxu0 %v241
    %316 = vmatpush2.msra.mxu0 %v240
    %317 = vmatprep.subr.mxu0 %v239
    %318 = vmatpush2.msra.mxu0 %v238
    %319 = vmatprep.subr.mxu0 %v237
    %320 = vmatpush2.msra.mxu0 %v236
    %321 = vmatprep.subr.mxu0 %v235
    %322 = vmatpush2.msra.mxu0 %v234
    %323 = vmatprep.subr.mxu0 %v233
    %324 = vmatpush2.msra.mxu0 %v232
    %325 = vmatprep.subr.mxu0 %v231
    %326 = vmatpush2.msra.mxu0 %v230
    %327 = vmatprep.subr.mxu0 %v229
    %328 = vmatpush2.msra.mxu0 %v228
    %329 = vmatprep.subr.mxu0 %v227
    %330 = vmatpush2.msra.mxu0 %v226
    %331 = vmatprep.mubr.f32.mxu0 %v258
    %332 = vmatmul.mubr.f32.gmra.mxu0 %v192
    %v333 = vpop.f32.mrf.mxu0
    %v334 = vadd.f32 %v249, %v333
    %v335 = vpop.f32.mrf.mxu0
    %v336 = vadd.f32 %v253, %v335
    %337 = vdwg.mxu0
    %v338 = vmax.f32 %v334, 0.0
    %v339 = vmax.f32 %v336, 0.0
    %v340 = vld [vmem:[%s5] sm:$0xff]
    %v341 = vld [vmem:[%s5 + $0x8] sm:$0xff]
    %v342 = vld [vmem:[%s5 + $0x10] sm:$0xff]
    %v343 = vld [vmem:[%s5 + $0x18] sm:$0xff]
    %v344 = vld [vmem:[%s5 + $0x20] sm:$0xff]
    %v345 = vld [vmem:[%s5 + $0x28] sm:$0xff]
    %v346 = vld [vmem:[%s5 + $0x30] sm:$0xff]
    %v347 = vld [vmem:[%s5 + $0x38] sm:$0xff]
    %v348 = vld [vmem:[%s5 + $0x40] sm:$0xff]
    %v349 = vld [vmem:[%s5 + $0x48] sm:$0xff]
    %v350 = vld [vmem:[%s5 + $0x50] sm:$0xff]
    %v351 = vld [vmem:[%s5 + $0x58] sm:$0xff]
    %v352 = vld [vmem:[%s5 + $0x60] sm:$0xff]
    %v353 = vld [vmem:[%s5 + $0x68] sm:$0xff]
    %v354 = vld [vmem:[%s5 + $0x70] sm:$0xff]
    %v355 = vld [vmem:[%s5 + $0x78] sm:$0xff]
    %v356 = vld [vmem:[%s5 + $0x80] sm:$0xff]
    %v357 = vld [vmem:[%s5 + $0x88] sm:$0x1f]
    %v358 = vld [vmem:[%s6] sm:$0x1]
    %v360 = vlaneseq
    %v361 = vshrl.u32 %v360, 7
    %v362 = vsub.s32 0, %v361
    %v363 = vrot.slane %v358, %v362
    %vm365 = vcmask 105472
    %v367 = vsel %vm365, %v339, 0
    %vm369 = vcmask 1044480
    %v371 = vsel %vm369, %v357, 0
    %373 = vmatprep.subr.mxu0 0.0
    %374 = vmatpush1.msra.mxu0 %v355
    %375 = vmatprep.subr.mxu0 0.0
    %376 = vmatpush1.msra.mxu0 %v354
    %377 = vmatprep.subr.mxu0 0.0
    %378 = vmatpush1.msra.mxu0 %v353
    %379 = vmatprep.subr.mxu0 0.0
    %380 = vmatpush1.msra.mxu0 %v352
    %381 = vmatprep.subr.mxu0 0.0
    %382 = vmatpush1.msra.mxu0 %v351
    %383 = vmatprep.subr.mxu0 0.0
    %384 = vmatpush1.msra.mxu0 %v350
    %385 = vmatprep.subr.mxu0 0.0
    %386 = vmatpush1.msra.mxu0 %v349
    %387 = vmatprep.subr.mxu0 0.0
    %388 = vmatpush1.msra.mxu0 %v348
    %389 = vmatprep.subr.mxu0 0.0
    %390 = vmatpush1.msra.mxu0 %v347
    %391 = vmatprep.subr.mxu0 0.0
    %392 = vmatpush1.msra.mxu0 %v346
    %393 = vmatprep.subr.mxu0 0.0
    %394 = vmatpush1.msra.mxu0 %v345
    %395 = vmatprep.subr.mxu0 0.0
    %396 = vmatpush1.msra.mxu0 %v344
    %397 = vmatprep.subr.mxu0 0.0
    %398 = vmatpush1.msra.mxu0 %v343
    %399 = vmatprep.subr.mxu0 0.0
    %400 = vmatpush1.msra.mxu0 %v342
    %401 = vmatprep.subr.mxu0 0.0
    %402 = vmatpush1.msra.mxu0 %v341
    %403 = vmatprep.subr.mxu0 0.0
    %404 = vmatpush1.msra.mxu0 %v340
    %405 = vmatprep.subr.mxu0 0.0
    %406 = vmatpush2.msra.mxu0 0.0
    %407 = vmatprep.subr.mxu0 0.0
    %408 = vmatpush2.msra.mxu0 0.0
    %409 = vmatprep.subr.mxu0 0.0
    %410 = vmatpush2.msra.mxu0 0.0
    %411 = vmatprep.subr.mxu0 0.0
    %412 = vmatpush2.msra.mxu0 0.0
    %413 = vmatprep.subr.mxu0 0.0
    %414 = vmatpush2.msra.mxu0 0.0
    %415 = vmatprep.subr.mxu0 0.0
    %416 = vmatpush2.msra.mxu0 0.0
    %417 = vmatprep.subr.mxu0 0.0
    %418 = vmatpush2.msra.mxu0 0.0
    %419 = vmatprep.subr.mxu0 0.0
    %420 = vmatpush2.msra.mxu0 0.0
    %421 = vmatprep.subr.mxu0 0.0
    %422 = vmatpush2.msra.mxu0 0.0
    %423 = vmatprep.subr.mxu0 0.0
    %424 = vmatpush2.msra.mxu0 0.0
    %425 = vmatprep.subr.mxu0 0.0
    %426 = vmatpush2.msra.mxu0 0.0
    %427 = vmatprep.subr.mxu0 0.0
    %428 = vmatpush2.msra.mxu0 0.0
    %429 = vmatprep.subr.mxu0 0.0
    %430 = vmatpush2.msra.mxu0 0.0
    %431 = vmatprep.subr.mxu0 0.0
    %432 = vmatpush2.msra.mxu0 0.0
    %433 = vmatprep.subr.mxu0 0.0
    %434 = vmatpush2.msra.mxu0 %v371
    %435 = vmatprep.subr.mxu0 0.0
    %436 = vmatpush2.msra.mxu0 %v356
    %437 = vmatprep.mubr.f32.mxu0 %v367
    %438 = vmatmul.mubr.f32.gmra.mxu0 %v338
    %v439 = vpop.f32.mrf.mxu0
    %v440 = vadd.f32 %v363, %v439
    %v441 = vpop.f32.mrf.mxu0
    %442 = vdwg.mxu0
    %v443 = vmax.f32 %v440, 0.0
    %v444 = vld [vmem:[%s7] sm:$0xff]
    %v445 = vld [vmem:[%s7 + $0x8] sm:$0xff]
    %v446 = vld [vmem:[%s7 + $0x10] sm:$0xff]
    %v447 = vld [vmem:[%s7 + $0x18] sm:$0xff]
    %v448 = vld [vmem:[%s7 + $0x20] sm:$0xff]
    %v449 = vld [vmem:[%s7 + $0x28] sm:$0xff]
    %v450 = vld [vmem:[%s7 + $0x30] sm:$0xff]
    %v451 = vld [vmem:[%s7 + $0x38] sm:$0xff]
    %v452 = vld [vmem:[%s7 + $0x40] sm:$0xff]
    %v453 = vld [vmem:[%s7 + $0x48] sm:$0xff]
    %v454 = vld [vmem:[%s7 + $0x50] sm:$0xff]
    %v455 = vld [vmem:[%s7 + $0x58] sm:$0xff]
    %v456 = vld [vmem:[%s7 + $0x60] sm:$0xff]
    %v457 = vld [vmem:[%s7 + $0x68] sm:$0x3f]
    %v458 = vld [vmem:[%s8] sm:$0x1]
    %v460 = vlaneseq
    %v461 = vshrl.u32 %v460, 7
    %v462 = vsub.s32 0, %v461
    %v463 = vrot.slane %v458, %v462
    %vm465 = vcmask 900096
    %v467 = vsel %vm465, %v443, 0
    %vm469 = vcmask 1045504
    %v471 = vsel %vm469, %v457, 0
    %473 = vmatprep.subr.mxu0 0.0
    %474 = vmatpush1.msra.mxu0 0.0
    %475 = vmatprep.subr.mxu0 0.0
    %476 = vmatpush1.msra.mxu0 0.0
    %477 = vmatprep.subr.mxu0 0.0
    %478 = vmatpush1.msra.mxu0 %v471
    %479 = vmatprep.subr.mxu0 0.0
    %480 = vmatpush1.msra.mxu0 %v456
    %481 = vmatprep.subr.mxu0 0.0
    %482 = vmatpush1.msra.mxu0 %v455
    %483 = vmatprep.subr.mxu0 0.0
    %484 = vmatpush1.msra.mxu0 %v454
    %485 = vmatprep.subr.mxu0 0.0
    %486 = vmatpush1.msra.mxu0 %v453
    %487 = vmatprep.subr.mxu0 0.0
    %488 = vmatpush1.msra.mxu0 %v452
    %489 = vmatprep.subr.mxu0 0.0
    %490 = vmatpush1.msra.mxu0 %v451
    %491 = vmatprep.subr.mxu0 0.0
    %492 = vmatpush1.msra.mxu0 %v450
    %493 = vmatprep.subr.mxu0 0.0
    %494 = vmatpush1.msra.mxu0 %v449
    %495 = vmatprep.subr.mxu0 0.0
    %496 = vmatpush1.msra.mxu0 %v448
    %497 = vmatprep.subr.mxu0 0.0
    %498 = vmatpush1.msra.mxu0 %v447
    %499 = vmatprep.subr.mxu0 0.0
    %500 = vmatpush1.msra.mxu0 %v446
    %501 = vmatprep.subr.mxu0 0.0
    %502 = vmatpush1.msra.mxu0 %v445
    %503 = vmatprep.subr.mxu0 0.0
    %504 = vmatpush1.msra.mxu0 %v444
    %505 = vmatprep.subr.mxu0 0.0
    %506 = vmatpush2.msra.mxu0 0.0
    %507 = vmatprep.subr.mxu0 0.0
    %508 = vmatpush2.msra.mxu0 0.0
    %509 = vmatprep.subr.mxu0 0.0
    %510 = vmatpush2.msra.mxu0 0.0
    %511 = vmatprep.subr.mxu0 0.0
    %512 = vmatpush2.msra.mxu0 0.0
    %513 = vmatprep.subr.mxu0 0.0
    %514 = vmatpush2.msra.mxu0 0.0
    %515 = vmatprep.subr.mxu0 0.0
    %516 = vmatpush2.msra.mxu0 0.0
    %517 = vmatprep.subr.mxu0 0.0
    %518 = vmatpush2.msra.mxu0 0.0
    %519 = vmatprep.subr.mxu0 0.0
    %520 = vmatpush2.msra.mxu0 0.0
    %521 = vmatprep.subr.mxu0 0.0
    %522 = vmatpush2.msra.mxu0 0.0
    %523 = vmatprep.subr.mxu0 0.0
    %524 = vmatpush2.msra.mxu0 0.0
    %525 = vmatprep.subr.mxu0 0.0
    %526 = vmatpush2.msra.mxu0 0.0
    %527 = vmatprep.subr.mxu0 0.0
    %528 = vmatpush2.msra.mxu0 0.0
    %529 = vmatprep.subr.mxu0 0.0
    %530 = vmatpush2.msra.mxu0 0.0
    %531 = vmatprep.subr.mxu0 0.0
    %532 = vmatpush2.msra.mxu0 0.0
    %533 = vmatprep.subr.mxu0 0.0
    %534 = vmatpush2.msra.mxu0 0.0
    %535 = vmatprep.subr.mxu0 0.0
    %536 = vmatpush2.msra.mxu0 0.0
    %537 = vmatprep.mubr.f32.mxu0 0.0
    %538 = vmatmul.mubr.f32.gmra.mxu0 %v467
    %v539 = vpop.f32.mrf.mxu0
    %v540 = vadd.f32 %v463, %v539
    %v541 = vpop.f32.mrf.mxu0
    %542 = vdwg.mxu0
    %v543 = vmax.f32 %v540, 0.0
    %v544 = vld [vmem:[%s9] sm:$0xff]
    %v545 = vld [vmem:[%s9 + $0x8] sm:$0xff]
    %v546 = vld [vmem:[%s9 + $0x10] sm:$0xff]
    %v547 = vld [vmem:[%s9 + $0x18] sm:$0xff]
    %v548 = vld [vmem:[%s9 + $0x20] sm:$0xff]
    %v549 = vld [vmem:[%s9 + $0x28] sm:$0xff]
    %v550 = vld [vmem:[%s9 + $0x30] sm:$0xff]
    %v551 = vld [vmem:[%s9 + $0x38] sm:$0xff]
    %v552 = vld [vmem:[%s9 + $0x40] sm:$0xff]
    %v553 = vld [vmem:[%s9 + $0x48] sm:$0xff]
    %v554 = vld [vmem:[%s9 + $0x50] sm:$0xff]
    %v555 = vld [vmem:[%s9 + $0x58] sm:$0xff]
    %v556 = vld [vmem:[%s9 + $0x60] sm:$0xf]
    %v557 = vld [vmem:[%s10] sm:$0x1]
    %v559 = vlaneseq
    %v560 = vshrl.u32 %v559, 7
    %v561 = vsub.s32 0, %v560
    %v562 = vrot.slane %v557, %v561
    %vm564 = vcmask 818176
    %v566 = vsel %vm564, %v543, 0
    %vm568 = vcmask 1043456
    %v570 = vsel %vm568, %v556, 0
    %572 = vmatprep.subr.mxu0 0.0
    %573 = vmatpush1.msra.mxu0 0.0
    %574 = vmatprep.subr.mxu0 0.0
    %575 = vmatpush1.msra.mxu0 0.0
    %576 = vmatprep.subr.mxu0 0.0
    %577 = vmatpush1.msra.mxu0 0.0
    %578 = vmatprep.subr.mxu0 0.0
    %579 = vmatpush1.msra.mxu0 %v570
    %580 = vmatprep.subr.mxu0 0.0
    %581 = vmatpush1.msra.mxu0 %v555
    %582 = vmatprep.subr.mxu0 0.0
    %583 = vmatpush1.msra.mxu0 %v554
    %584 = vmatprep.subr.mxu0 0.0
    %585 = vmatpush1.msra.mxu0 %v553
    %586 = vmatprep.subr.mxu0 0.0
    %587 = vmatpush1.msra.mxu0 %v552
    %588 = vmatprep.subr.mxu0 0.0
    %589 = vmatpush1.msra.mxu0 %v551
    %590 = vmatprep.subr.mxu0 0.0
    %591 = vmatpush1.msra.mxu0 %v550
    %592 = vmatprep.subr.mxu0 0.0
    %593 = vmatpush1.msra.mxu0 %v549
    %594 = vmatprep.subr.mxu0 0.0
    %595 = vmatpush1.msra.mxu0 %v548
    %596 = vmatprep.subr.mxu0 0.0
    %597 = vmatpush1.msra.mxu0 %v547
    %598 = vmatprep.subr.mxu0 0.0
    %599 = vmatpush1.msra.mxu0 %v546
    %600 = vmatprep.subr.mxu0 0.0
    %601 = vmatpush1.msra.mxu0 %v545
    %602 = vmatprep.subr.mxu0 0.0
    %603 = vmatpush1.msra.mxu0 %v544
    %604 = vmatprep.subr.mxu0 0.0
    %605 = vmatpush2.msra.mxu0 0.0
    %606 = vmatprep.subr.mxu0 0.0
    %607 = vmatpush2.msra.mxu0 0.0
    %608 = vmatprep.subr.mxu0 0.0
    %609 = vmatpush2.msra.mxu0 0.0
    %610 = vmatprep.subr.mxu0 0.0
    %611 = vmatpush2.msra.mxu0 0.0
    %612 = vmatprep.subr.mxu0 0.0
    %613 = vmatpush2.msra.mxu0 0.0
    %614 = vmatprep.subr.mxu0 0.0
    %615 = vmatpush2.msra.mxu0 0.0
    %616 = vmatprep.subr.mxu0 0.0
    %617 = vmatpush2.msra.mxu0 0.0
    %618 = vmatprep.subr.mxu0 0.0
    %619 = vmatpush2.msra.mxu0 0.0
    %620 = vmatprep.subr.mxu0 0.0
    %621 = vmatpush2.msra.mxu0 0.0
    %622 = vmatprep.subr.mxu0 0.0
    %623 = vmatpush2.msra.mxu0 0.0
    %624 = vmatprep.subr.mxu0 0.0
    %625 = vmatpush2.msra.mxu0 0.0
    %626 = vmatprep.subr.mxu0 0.0
    %627 = vmatpush2.msra.mxu0 0.0
    %628 = vmatprep.subr.mxu0 0.0
    %629 = vmatpush2.msra.mxu0 0.0
    %630 = vmatprep.subr.mxu0 0.0
    %631 = vmatpush2.msra.mxu0 0.0
    %632 = vmatprep.subr.mxu0 0.0
    %633 = vmatpush2.msra.mxu0 0.0
    %634 = vmatprep.subr.mxu0 0.0
    %635 = vmatpush2.msra.mxu0 0.0
    %636 = vmatprep.mubr.f32.mxu0 0.0
    %637 = vmatmul.mubr.f32.gmra.mxu0 %v566
    %v638 = vpop.f32.mrf.mxu0
    %v639 = vadd.f32 %v562, %v638
    %v640 = vpop.f32.mrf.mxu0
    %641 = vdwg.mxu0
    %v642 = vmax.f32 %v639, 0.0
    %v643 = vld [vmem:[%s11] sm:$0xff]
    %v644 = vld [vmem:[%s11 + $0x8] sm:$0xff]
    %v645 = vld [vmem:[%s11 + $0x10] sm:$0xff]
    %v646 = vld [vmem:[%s11 + $0x18] sm:$0xff]
    %v647 = vld [vmem:[%s11 + $0x20] sm:$0xff]
    %v648 = vld [vmem:[%s12] sm:$0x1]
    %v650 = vlaneseq
    %v651 = vshrl.u32 %v650, 7
    %v652 = vsub.s32 0, %v651
    %v653 = vrot.slane %v648, %v652
    %vm655 = vcmask 326656
    %v657 = vsel %vm655, %v642, 0
    %659 = vmatprep.subr.mxu0 0.0
    %660 = vmatpush1.msra.mxu0 0.0
    %661 = vmatprep.subr.mxu0 0.0
    %662 = vmatpush1.msra.mxu0 0.0
    %663 = vmatprep.subr.mxu0 0.0
    %664 = vmatpush1.msra.mxu0 0.0
    %665 = vmatprep.subr.mxu0 0.0
    %666 = vmatpush1.msra.mxu0 0.0
    %667 = vmatprep.subr.mxu0 0.0
    %668 = vmatpush1.msra.mxu0 0.0
    %669 = vmatprep.subr.mxu0 0.0
    %670 = vmatpush1.msra.mxu0 0.0
    %671 = vmatprep.subr.mxu0 0.0
    %672 = vmatpush1.msra.mxu0 0.0
    %673 = vmatprep.subr.mxu0 0.0
    %674 = vmatpush1.msra.mxu0 0.0
    %675 = vmatprep.subr.mxu0 0.0
    %676 = vmatpush1.msra.mxu0 0.0
    %677 = vmatprep.subr.mxu0 0.0
    %678 = vmatpush1.msra.mxu0 0.0
    %679 = vmatprep.subr.mxu0 0.0
    %680 = vmatpush1.msra.mxu0 0.0
    %681 = vmatprep.subr.mxu0 0.0
    %682 = vmatpush1.msra.mxu0 %v647
    %683 = vmatprep.subr.mxu0 0.0
    %684 = vmatpush1.msra.mxu0 %v646
    %685 = vmatprep.subr.mxu0 0.0
    %686 = vmatpush1.msra.mxu0 %v645
    %687 = vmatprep.subr.mxu0 0.0
    %688 = vmatpush1.msra.mxu0 %v644
    %689 = vmatprep.subr.mxu0 0.0
    %690 = vmatpush1.msra.mxu0 %v643
    %691 = vmatprep.subr.mxu0 0.0
    %692 = vmatpush2.msra.mxu0 0.0
    %693 = vmatprep.subr.mxu0 0.0
    %694 = vmatpush2.msra.mxu0 0.0
    %695 = vmatprep.subr.mxu0 0.0
    %696 = vmatpush2.msra.mxu0 0.0
    %697 = vmatprep.subr.mxu0 0.0
    %698 = vmatpush2.msra.mxu0 0.0
    %699 = vmatprep.subr.mxu0 0.0
    %700 = vmatpush2.msra.mxu0 0.0
    %701 = vmatprep.subr.mxu0 0.0
    %702 = vmatpush2.msra.mxu0 0.0
    %703 = vmatprep.subr.mxu0 0.0
    %704 = vmatpush2.msra.mxu0 0.0
    %705 = vmatprep.subr.mxu0 0.0
    %706 = vmatpush2.msra.mxu0 0.0
    %707 = vmatprep.subr.mxu0 0.0
    %708 = vmatpush2.msra.mxu0 0.0
    %709 = vmatprep.subr.mxu0 0.0
    %710 = vmatpush2.msra.mxu0 0.0
    %711 = vmatprep.subr.mxu0 0.0
    %712 = vmatpush2.msra.mxu0 0.0
    %713 = vmatprep.subr.mxu0 0.0
    %714 = vmatpush2.msra.mxu0 0.0
    %715 = vmatprep.subr.mxu0 0.0
    %716 = vmatpush2.msra.mxu0 0.0
    %717 = vmatprep.subr.mxu0 0.0
    %718 = vmatpush2.msra.mxu0 0.0
    %719 = vmatprep.subr.mxu0 0.0
    %720 = vmatpush2.msra.mxu0 0.0
    %721 = vmatprep.subr.mxu0 0.0
    %722 = vmatpush2.msra.mxu0 0.0
    %723 = vmatprep.mubr.f32.mxu0 0.0
    %724 = vmatmul.mubr.f32.gmra.mxu0 %v657
    %v725 = vpop.f32.mrf.mxu0
    %v726 = vadd.f32 %v653, %v725
    %v727 = vpop.f32.mrf.mxu0
    %728 = vdwg.mxu0
    %vm729 = vcmask 9216
    %730 = vst.msk [vmem:[#allocation2] sm:$0x3] %vm729, %v726
    // Predicated region
    $region54: #{forward.1} parent=1 // pred_check
      _
    $region55: #{forward.1} parent=1 // pred_check_branch
      %732 = sbr.rel (0) target = $region57
    $region56: #{forward.1} parent=1 // pred_region
      %s734 = ssub.s32 32, 32
      %735 = vsyncadd [#allocation3], %s734
      %s737 = sshll.u32 [#allocation2], 4
      %s738 = int_to_ptr.vmem [resolvable:$true] %s737
      %740 = dma.vmem_to_hbm [thread:$0]  %s738, 32, %s13, [#allocation3]
    $region57: #{forward.1} parent=1 // pred_fallthru
      _
    // Predicated region
    $region58: #{forward.1} parent=1 // pred_check
      _
    $region59: #{forward.1} parent=1 // pred_check_branch
      %742 = sbr.rel (0) target = $region61
    $region60: #{forward.1} parent=1 // pred_region
      %743 = dma.done [#allocation3], 32
    $region61: #{forward.1} parent=1 // pred_fallthru
      _
    %744 = vsyncpa [#allocation3], 1

</llo_original>
